<compile_context>
chip_gen: v5e
topology: v5e:2x2
jax: 0.10.0
libtpu: 0.0.40
codegen_flags: <defaults>
</compile_context>

<pallas_src>
import functools

import numpy as np
import jax
import jax.numpy as jnp
from jax.experimental import pallas as pl
from jax.experimental.pallas import tpu as pltpu

FILT = np.array([1.0, 4.0, 6.0, 4.0, 1.0], dtype=np.float32)
FILT /= FILT.sum()
FILT_SIZE = 5
STRIDE = 2
PAD = 2            # reflection pad each side for filt_size=5
LANE = 128
SUBLANE = 8
ROW_BLOCK = 256    # rows (N*C) per grid step


def _round_up(a, b):
    return (a + b - 1) // b * b


@functools.lru_cache(maxsize=None)
def _build_blur_matrix(L, Lpad, Lout_pad):
    """Fold ReflectionPad1d(2) + depthwise conv1d([1,4,6,4,1]/16, stride=2) into one
    (Lpad, Lout_pad) matrix M so that out = y_full @ M, where
    y_full[:, i] = max(x[:, i], x[:, i+1]).  Only rows 0..L-2 and cols 0..Lout-1 are
    nonzero; the rest is pure alignment padding."""
    Lm = L - 1                                          # maxpool(k=2, s=1) output length
    Lout = (Lm + 2 * PAD - FILT_SIZE) // STRIDE + 1

    def refl(p):
        o = p - PAD
        if o < 0:
            o = -o
        if o >= Lm:
            o = 2 * (Lm - 1) - o
        return o

    M = np.zeros((Lpad, Lout_pad), dtype=np.float32)
    for k in range(Lout):
        for j in range(FILT_SIZE):
            M[refl(STRIDE * k + j), k] += FILT[j]
    return M


def _maxpool_blur_kernel(x_ref, m_ref, o_ref):
    x = x_ref[...]                                      # (RB, Lpad) row-block
    # MaxPool1d(kernel=2, stride=1), lane-aligned over the full padded width:
    # y[i] = max(x[i], x[i+1]).  The wrap-around lane and the zero-pad lanes hit
    # all-zero rows of M, so they are inert.  (Mosaic lowers the static roll to a
    # cheap lane rotate/concat on the XLU.)
    y = jnp.maximum(x, jnp.roll(x, shift=-1, axis=-1))
    # Reflect-pad + 5-tap blur + stride-2 conv as one MXU matmul, f32 accumulate.
    o_ref[...] = jnp.dot(
        y.astype(jnp.float32), m_ref[...], preferred_element_type=jnp.float32
    ).astype(o_ref.dtype)


def maxpool_aa(x, *, row_block=ROW_BLOCK):
    N, C, L = x.shape
    if L < 4:
        raise ValueError("MaxPoolAA with reflect pad 2 requires L >= 4.")
    R = N * C
    Lm = L - 1
    Lout = (Lm + 2 * PAD - FILT_SIZE) // STRIDE + 1

    Lpad = _round_up(L, LANE)            # lane-aligned K for the matmul
    Lout_pad = _round_up(Lout, LANE)     # lane-dense output stores
    RB = min(row_block, _round_up(R, SUBLANE))
    Rpad = _round_up(R, RB)

    M = jnp.asarray(_build_blur_matrix(L, Lpad, Lout_pad))

    x2d = x.reshape(R, L)
    if (Rpad, Lpad) != (R, L):
        x2d = jnp.pad(x2d, ((0, Rpad - R), (0, Lpad - L)))

    flops = 2 * Rpad * Lpad * Lout_pad + Rpad * Lpad
    bytes_accessed = 4 * (Rpad * Lpad + Lpad * Lout_pad + Rpad * Lout_pad)

    out = pl.pallas_call(
        _maxpool_blur_kernel,
        out_shape=jax.ShapeDtypeStruct((Rpad, Lout_pad), x.dtype),
        grid_spec=pltpu.PrefetchScalarGridSpec(
            num_scalar_prefetch=0,
            grid=(Rpad // RB,),
            in_specs=[
                pl.BlockSpec((RB, Lpad), lambda i: (i, 0)),        # row-block of x
                pl.BlockSpec((Lpad, Lout_pad), lambda i: (0, 0)),  # shared blur matrix
            ],
            out_specs=pl.BlockSpec((RB, Lout_pad), lambda i: (i, 0)),
        ),
        compiler_params=pltpu.CompilerParams(
            dimension_semantics=("parallel",),
            vmem_limit_bytes=64 * 1024 * 1024,
        ),
        cost_estimate=pl.CostEstimate(
            flops=flops, transcendentals=0, bytes_accessed=bytes_accessed),
    )(x2d, M)

    return out[:R, :Lout].reshape(N, C, Lout)


def _reference(x):
    x = np.asarray(x)
    y = np.maximum(x[:, :, :-1], x[:, :, 1:])                       # MaxPool1d(2, 1)
    p = np.pad(y, ((0, 0), (0, 0), (PAD, PAD)), mode="reflect")     # ReflectionPad1d(2)
    Lp = p.shape[-1]
    Lout = (Lp - FILT_SIZE) // STRIDE + 1
    out = np.zeros((x.shape[0], x.shape[1], Lout), dtype=np.float32)
    for k in range(Lout):                                           # depthwise conv, stride 2
        out[:, :, k] = np.tensordot(
            p[:, :, STRIDE * k: STRIDE * k + FILT_SIZE], FILT, axes=([2], [0]))
    return out


if __name__ == "__main__":
    key = jax.random.PRNGKey(0)
    N, C, L = 2, 4, 16
    x = jax.random.normal(key, (N, C, L), dtype=jnp.float32)

    out = maxpool_aa(x)
    out = jax.block_until_ready(out)

    ref = _reference(np.array(x))
    np.testing.assert_allclose(np.array(out), ref, rtol=1e-5, atol=1e-5)
    print("KERNEL_OK")
</pallas_src>

<mosaic_0001>
module attributes {stable_mosaic.version = 11 : i64} {
  func.func @_maxpool_blur_kernel(%arg0: i32, %arg1: memref<8x128xf32, #tpu.memory_space<vmem>>, %arg2: memref<128x128xf32, #tpu.memory_space<vmem>>, %arg3: memref<8x128xf32, #tpu.memory_space<vmem>>) attributes {dimension_semantics = [#tpu.dimension_semantics<parallel>], iteration_bounds = array<i64: 1>, scalar_prefetch = 0 : i64, scratch_operands = 0 : i64, tpu.core_type = #tpu.core_type<tc>, window_params = [{transform_indices = @transform_0, window_bounds = array<i64: 8, 128>}, {pipeline_mode = #tpu.pipeline_mode<synchronous>, transform_indices = @transform_1, window_bounds = array<i64: 128, 128>}, {transform_indices = @transform_2, window_bounds = array<i64: 8, 128>}]} {
    %c0 = arith.constant 0 : index
    %c0_0 = arith.constant 0 : index
    %0 = vector.load %arg1[%c0, %c0_0] : memref<8x128xf32, #tpu.memory_space<vmem>>, vector<8x128xf32>
    %1 = vector.extract_strided_slice %0 {offsets = [0, 1], sizes = [8, 127], strides = [1, 1]} : vector<8x128xf32> to vector<8x127xf32>
    %2 = vector.extract_strided_slice %0 {offsets = [0, 0], sizes = [8, 1], strides = [1, 1]} : vector<8x128xf32> to vector<8x1xf32>
    %3 = tpu.concatenate %1, %2 in 1 : vector<8x127xf32>, vector<8x1xf32> -> vector<8x128xf32>
    %4 = arith.maximumf %0, %3 : vector<8x128xf32>
    %c0_1 = arith.constant 0 : index
    %c0_2 = arith.constant 0 : index
    %5 = vector.load %arg2[%c0_1, %c0_2] : memref<128x128xf32, #tpu.memory_space<vmem>>, vector<128x128xf32>
    %cst = arith.constant dense<0.000000e+00> : vector<8x128xf32>
    %6 = tpu.matmul %4, %5, %cst {dimension_numbers = #tpu.dot_dimension_numbers<[1], [0], [0], [1], [0, 0, 1, 1], [], []>} : vector<8x128xf32>, vector<128x128xf32>, vector<8x128xf32> -> vector<8x128xf32>
    %c0_3 = arith.constant 0 : index
    %c0_4 = arith.constant 0 : index
    %7 = vector.load %arg3[%c0_3, %c0_4] : memref<8x128xf32, #tpu.memory_space<vmem>>, vector<8x128xf32>
    tpu.vector_store %arg3[%c0_3, %c0_4], %6 {strides = array<i32>} : memref<8x128xf32, #tpu.memory_space<vmem>>, vector<8x128xf32>,
    return
  }
  func.func @transform_0(%arg0: i32) -> (i32, i32) {
    %c0_i32 = arith.constant 0 : i32
    %c0_i32_0 = arith.constant 0 : i32
    return %arg0, %c0_i32 : i32, i32
  }
  func.func @transform_1(%arg0: i32) -> (i32, i32) {
    %c0_i32 = arith.constant 0 : i32
    %c0_i32_0 = arith.constant 0 : i32
    %c0_i32_1 = arith.constant 0 : i32
    return %c0_i32, %c0_i32_0 : i32, i32
  }
  func.func @transform_2(%arg0: i32) -> (i32, i32) {
    %c0_i32 = arith.constant 0 : i32
    %c0_i32_0 = arith.constant 0 : i32
    return %arg0, %c0_i32 : i32, i32
  }
}

</mosaic_0001>

<llo_original>
// kernel: tpu_custom_call.1
$region0: #{tpu_custom_call.1}
  #allocation0 [shape = 'u32[]', space=smem, size = 0x4, offset = 0x4, fixed_abs, tag = 'smem constant byte address 0x4 - core index']
  #allocation1 [shape = 'u32[72,128]{1,0:T(1,128)}', space=vmem, size = 0x9000, scoped, tag = 'internal scratch']
  %s0 = inlined_call_operand.hbm [shape: f32[8,128], index: 0, kind: input, shape index: {}]
  %s1 = inlined_call_operand.hbm [shape: f32[128,128], index: 1, kind: input, shape index: {}]
  %s2 = inlined_call_operand.hbm [shape: f32[8,128], index: 2, kind: output, shape index: {}]
  %s3 = sld [smem:[#allocation0]]
  $region26: #{tpu_custom_call.1} parent=0
    _
  %s5 = ssub.s32 1, %s3
  %s6 = scalar_select 0, %s5, %s3
  $region1: #{tpu_custom_call.1} parent=0
    #allocation2 [shape = 'u8[4096]{0}', space=vmem, size = 0x1000, scoped, tag = 'input window, operand 0, single buffered']
    #allocation3 [shape = 's32[1]{0}', space=sflag, size = 0x4, scoped, tag = 'scoped memory for tpu_custom_call.1']
    #allocation4 [shape = 's32[1]{0}', space=sflag, size = 0x4, scoped, tag = 'scoped memory for tpu_custom_call.1']
    #allocation5 [shape = 'u8[65536]{0}', space=vmem, size = 0x10000, scoped, tag = 'input window, operand 1, single buffered']
    #allocation6 [shape = 's32[1]{0}', space=sflag, size = 0x4, scoped, tag = 'scoped memory for tpu_custom_call.1']
    #allocation7 [shape = 'u8[4096]{0}', space=vmem, size = 0x1000, scoped, tag = 'output window, operand 0, single buffered']
    %7 = vsyncpa [#allocation3], 0
    %8 = vsyncpa [#allocation6], 0
    %9 = vsyncpa [#allocation4], 0
    // Predicated region
    $region2: #{tpu_custom_call.1} parent=1 // pred_check
      _
    $region3: #{tpu_custom_call.1} parent=1 // pred_check_branch
      %11 = sbr.rel (0) target = $region5
    $region4: #{tpu_custom_call.1} parent=1 // pred_region
      %13 = vsyncadd [#allocation3], 0
      %s15 = sshll.u32 %s0, 4
      %s16 = int_to_ptr.hbm [resolvable:$true] %s15
      %s17 = sshll.u32 [#allocation2], 4
      %s18 = int_to_ptr.vmem [resolvable:$true] %s17
      %20 = dma.hbm_to_vmem [thread:$0]  %s16, 128, %s18, [#allocation3]
    $region5: #{tpu_custom_call.1} parent=1 // pred_fallthru
      _
    // Predicated region
    $region6: #{tpu_custom_call.1} parent=1 // pred_check
      _
    $region7: #{tpu_custom_call.1} parent=1 // pred_check_branch
      %22 = sbr.rel (0) target = $region9
    $region8: #{tpu_custom_call.1} parent=1 // pred_region
      %24 = vsyncadd [#allocation6], 0
      %s25 = sshll.u32 %s1, 4
      %s26 = int_to_ptr.hbm [resolvable:$true] %s25
      %s27 = sshll.u32 [#allocation5], 4
      %s28 = int_to_ptr.vmem [resolvable:$true] %s27
      %33 = dma.hbm_to_vmem [thread:$0]  %s26, 2048, %s28, [#allocation6], 128, 128, 8
    $region9: #{tpu_custom_call.1} parent=1 // pred_fallthru
      _
    // Predicated region
    $region10: #{tpu_custom_call.1} parent=1 // pred_check
      _
    $region11: #{tpu_custom_call.1} parent=1 // pred_check_branch
      %35 = sbr.rel (0) target = $region13
    $region12: #{tpu_custom_call.1} parent=1 // pred_region
      %37 = dma.done [#allocation3], 128
    $region13: #{tpu_custom_call.1} parent=1 // pred_fallthru
      _
    // Predicated region
    $region14: #{tpu_custom_call.1} parent=1 // pred_check
      _
    $region15: #{tpu_custom_call.1} parent=1 // pred_check_branch
      %39 = sbr.rel (0) target = $region17
    $region16: #{tpu_custom_call.1} parent=1 // pred_region
      %41 = dma.done [#allocation6], 2048
    $region17: #{tpu_custom_call.1} parent=1 // pred_fallthru
      _
    %v42 = vld [vmem:[#allocation2] sm:$0xff]
    %44 = vrot.lane.b32.xlu0 %v42, 127
    %v45 = vpop.permute.xlu0 %44
    %v47 = vmax.f32 %v42, %v45
    %v48 = vld [vmem:[#allocation5] sm:$0xff]
    %v49 = vld [vmem:[#allocation5 + $0x8] sm:$0xff]
    %v50 = vld [vmem:[#allocation5 + $0x10] sm:$0xff]
    %v51 = vld [vmem:[#allocation5 + $0x18] sm:$0xff]
    %v52 = vld [vmem:[#allocation5 + $0x20] sm:$0xff]
    %v53 = vld [vmem:[#allocation5 + $0x28] sm:$0xff]
    %v54 = vld [vmem:[#allocation5 + $0x30] sm:$0xff]
    %v55 = vld [vmem:[#allocation5 + $0x38] sm:$0xff]
    %v56 = vld [vmem:[#allocation5 + $0x40] sm:$0xff]
    %v57 = vld [vmem:[#allocation5 + $0x48] sm:$0xff]
    %v58 = vld [vmem:[#allocation5 + $0x50] sm:$0xff]
    %v59 = vld [vmem:[#allocation5 + $0x58] sm:$0xff]
    %v60 = vld [vmem:[#allocation5 + $0x60] sm:$0xff]
    %v61 = vld [vmem:[#allocation5 + $0x68] sm:$0xff]
    %v62 = vld [vmem:[#allocation5 + $0x70] sm:$0xff]
    %v63 = vld [vmem:[#allocation5 + $0x78] sm:$0xff]
    %64 = vmatpush.msra.mxu0 %v63
    %65 = vmatpush.msra.mxu0 %v62
    %66 = vmatpush.msra.mxu0 %v61
    %67 = vmatpush.msra.mxu0 %v60
    %68 = vmatpush.msra.mxu0 %v59
    %69 = vmatpush.msra.mxu0 %v58
    %70 = vmatpush.msra.mxu0 %v57
    %71 = vmatpush.msra.mxu0 %v56
    %72 = vmatpush.msra.mxu0 %v55
    %73 = vmatpush.msra.mxu0 %v54
    %74 = vmatpush.msra.mxu0 %v53
    %75 = vmatpush.msra.mxu0 %v52
    %76 = vmatpush.msra.mxu0 %v51
    %77 = vmatpush.msra.mxu0 %v50
    %78 = vmatpush.msra.mxu0 %v49
    %79 = vmatpush.msra.mxu0 %v48
    %80 = vmatmul.f32.gmra.mxu0 %v47
    %v81 = vpop.f32.mrf.mxu0
    %v82 = vadd.f32 0.0, %v81
    %83 = vdwg.mxu0
    %84 = vst [vmem:[#allocation7] sm:$0xff] %v82
    // Predicated region
    $region18: #{tpu_custom_call.1} parent=1 // pred_check
      _
    $region19: #{tpu_custom_call.1} parent=1 // pred_check_branch
      %86 = sbr.rel (0) target = $region21
    $region20: #{tpu_custom_call.1} parent=1 // pred_region
      %88 = vsyncadd [#allocation4], 0
      %s90 = sshll.u32 [#allocation7], 4
      %s91 = int_to_ptr.vmem [resolvable:$true] %s90
      %s92 = sshll.u32 %s2, 4
      %s93 = int_to_ptr.hbm [resolvable:$true] %s92
      %95 = dma.vmem_to_hbm [thread:$0]  %s91, 128, %s93, [#allocation4]
    $region21: #{tpu_custom_call.1} parent=1 // pred_fallthru
      _
    // Predicated region
    $region22: #{tpu_custom_call.1} parent=1 // pred_check
      _
    $region23: #{tpu_custom_call.1} parent=1 // pred_check_branch
      %97 = sbr.rel (0) target = $region25
    $region24: #{tpu_custom_call.1} parent=1 // pred_region
      %99 = dma.done [#allocation4], 128
    $region25: #{tpu_custom_call.1} parent=1 // pred_fallthru
      _
    %100 = vsyncpa [#allocation3], 1
    %101 = vsyncpa [#allocation6], 1
    %102 = vsyncpa [#allocation4], 1

</llo_original>
